<compile_context>
chip_gen: v6e
topology: v6e:2x2x1
jax: 0.10.0
libtpu: 0.0.40
codegen_flags: <defaults>
</compile_context>

<pallas_src>
import functools

import jax
import jax.numpy as jnp
from jax.experimental import pallas as pl
from jax.experimental.pallas import tpu as pltpu

_LANE = 128
_MiB = 1024 * 1024
# Above this size, force >=2 row blocks so v7x's 2 TensorCores both get work.
_MIN_SPLIT_BYTES = 1 * _MiB
# Above this size, a <128-wide last dim is repacked lane-dense (prefix + tail).
_NARROW_SPLIT_BYTES = 1 * _MiB


def _relu_kernel(x_ref, o_ref):
    # Pure VPU elementwise max(0, x) on the whole VMEM tile.
    x = x_ref[...]
    o_ref[...] = jnp.maximum(x, jnp.zeros((), dtype=x.dtype))


def _sublane_multiple(dtype) -> int:
    # Packed sublane count per vreg: f32/i32 -> 8, bf16 -> 16, int8/fp8 -> 32.
    return {4: 8, 2: 16, 1: 32}.get(jnp.dtype(dtype).itemsize, 8)


@functools.lru_cache(maxsize=None)
def _chip_config():
    """Returns (per-block byte target, physical VMEM bytes) for this TPU gen."""
    try:
        kind = jax.devices()[0].device_kind.lower()
    except Exception:  # pragma: no cover - defensive
        kind = ""
    vmem_cap = None
    try:
        vmem_cap = int(pltpu.get_tpu_info().vmem_capacity_bytes)
    except Exception:
        vmem_cap = None
    if not vmem_cap:
        vmem_cap = 64 * _MiB if "v7" in kind else 128 * _MiB
    if "v7" in kind:
        target = 8 * _MiB   # 3.2 TB/s HBM: big blocks amortize per-step overhead
    elif "v6" in kind:
        target = 6 * _MiB
    else:
        target = 4 * _MiB   # v5e & older / unknown: keep footprint near defaults
    # Double-buffered in+out (4x block) must stay well under physical VMEM.
    target = min(target, (vmem_cap * 6 // 10) // 4)
    return target, vmem_cap


def _relu_2d(x2: jax.Array, min_blocks: int = 1, donate: bool = False) -> jax.Array:
    """ReLU on a 2-D array via one pallas_call with row/column tiling."""
    rows, cols = x2.shape
    dtype = x2.dtype
    itemsize = jnp.dtype(dtype).itemsize
    sub = _sublane_multiple(dtype)
    target, vmem_cap = _chip_config()

    # Column tile: full width if it fits (or is <128, full-dim exception);
    # otherwise 128-multiple chunks so the minimum block is byte-bounded.
    if cols < _LANE or cols * itemsize * sub <= target:
        tile_cols = cols
    else:
        max_cols = max(_LANE, (target // (itemsize * sub)) // _LANE * _LANE)
        tile_cols = min(max_cols, (cols // _LANE) * _LANE)

    # Row tile: ~target bytes per block, rounded to the dtype sublane multiple.
    tile_rows = max(sub, (target // (tile_cols * itemsize)) // sub * sub)
    if tile_rows >= rows:
        tile_rows = rows  # single row-block: block dim == full array dim

    # Megacore: guarantee >=2 blocks for >=1 MiB arrays (v7x has 2 TCs).
    if pl.cdiv(rows, tile_rows) * pl.cdiv(cols, tile_cols) < min_blocks and rows > sub:
        split = ((rows + 1) // 2 + sub - 1) // sub * sub
        if split < rows:
            tile_rows = split

    row_blocks = pl.cdiv(rows, tile_rows)
    col_blocks = pl.cdiv(cols, tile_cols)

    if col_blocks == 1:
        grid = (row_blocks,)
        index_map = lambda i: (i, 0)
        semantics = ("parallel",)
    else:
        grid = (row_blocks, col_blocks)
        index_map = lambda i, j: (i, j)
        semantics = ("parallel", "parallel")

    block_bytes = tile_rows * tile_cols * itemsize
    compiler_kwargs = dict(dimension_semantics=semantics)
    # 2 input buffers + 2 output buffers (double buffering) + slack.
    needed = 4 * block_bytes + 2 * _MiB
    if needed > 12 * _MiB:
        compiler_kwargs["vmem_limit_bytes"] = int(
            min(vmem_cap * 3 // 4, needed + 4 * _MiB))

    call_kwargs = {}
    if donate:
        # Only beneficial if the caller actually donates the input buffer.
        call_kwargs["input_output_aliases"] = {0: 0}

    return pl.pallas_call(
        _relu_kernel,
        out_shape=jax.ShapeDtypeStruct((rows, cols), dtype),
        grid_spec=pltpu.PrefetchScalarGridSpec(
            num_scalar_prefetch=0,
            grid=grid,
            in_specs=[pl.BlockSpec((tile_rows, tile_cols), index_map)],
            out_specs=pl.BlockSpec((tile_rows, tile_cols), index_map),
        ),
        compiler_params=pltpu.CompilerParams(**compiler_kwargs),
        **call_kwargs,
    )(x2)


def relu(x: jax.Array, *, donate: bool = False) -> jax.Array:
    """ReLU via Pallas TPU kernels. Matches np.maximum(0, x) elementwise."""
    orig_shape = x.shape
    dtype = x.dtype
    total = int(x.size)
    if total == 0:
        return x
    itemsize = jnp.dtype(dtype).itemsize
    sub = _sublane_multiple(dtype)
    target, _ = _chip_config()
    total_bytes = total * itemsize
    min_blocks = 2 if total_bytes > _MIN_SPLIT_BYTES else 1
    last = orig_shape[-1] if x.ndim >= 1 else 1

    # 1) Last dim already lane-aligned: collapse leading dims (layout-free).
    if last % _LANE == 0 and total // last >= sub:
        out = _relu_2d(x.reshape(total // last, last), min_blocks, donate)
        return out.reshape(orig_shape)

    # 2) Total lane-aligned: flatten into a wide lane-dense slab.
    if total % _LANE == 0:
        cols = _LANE
        while (total % (cols * 2) == 0
               and (cols * 2) * itemsize * sub <= target
               and total // (cols * 2) >= 2 * sub):
            cols *= 2
        out = _relu_2d(x.reshape(total // cols, cols), min_blocks, donate)
        return out.reshape(orig_shape)

    # 3) Large array with a narrow (<128) last dim: process the largest
    #    lane-dense prefix at full store width plus a tiny ragged tail.
    if 1 <= last < _LANE and total_bytes >= _NARROW_SPLIT_BYTES:
        flat = x.reshape(total)
        cols = _LANE
        while ((cols * 2) * itemsize * sub <= target
               and total // (cols * 2) >= 2 * sub):
            cols *= 2
        main = (total // cols) * cols
        head = _relu_2d(flat[:main].reshape(main // cols, cols), min_blocks)
        tail_len = total - main
        if tail_len:
            tail = _relu_2d(flat[main:].reshape(1, tail_len)).reshape(tail_len)
            out_flat = jnp.concatenate([head.reshape(main), tail])
        else:
            out_flat = head.reshape(main)
        return out_flat.reshape(orig_shape)

    # 4) Ragged fallback: keep the original last axis as the lane axis; rows
    #    (and 128-multiple column chunks, for huge last dims) tiled in _relu_2d.
    cols = max(1, last)
    out = _relu_2d(x.reshape(total // cols, cols), min_blocks, donate)
    return out.reshape(orig_shape)


if __name__ == "__main__":
    key = jax.random.PRNGKey(0)

    # Conformer activation typically sees (batch, seq, hidden).
    x = jax.random.normal(key, (2, 8, 32), dtype=jnp.float32)
    y = relu(x)
    jax.block_until_ready(y)
    assert y.shape == x.shape and y.dtype == x.dtype
    assert bool(jnp.allclose(y, jnp.maximum(0.0, x))), "mismatch vs reference ReLU (f32)"

    # bf16 path (different sublane packing / lane-dense reshape).
    xb = jax.random.normal(jax.random.PRNGKey(1), (2, 8, 32)).astype(jnp.bfloat16)
    yb = relu(xb)
    jax.block_until_ready(yb)
    assert yb.dtype == jnp.bfloat16 and yb.shape == xb.shape
    assert bool(jnp.all(yb == jnp.maximum(xb, jnp.zeros((), jnp.bfloat16)))), \
        "mismatch vs reference ReLU (bf16)"

    # Odd small shape exercising the simple ragged fallback (full-array block).
    xo = jax.random.normal(jax.random.PRNGKey(2), (3, 50), dtype=jnp.float32)
    yo = relu(xo)
    jax.block_until_ready(yo)
    assert bool(jnp.allclose(yo, jnp.maximum(0.0, xo))), "mismatch vs reference ReLU (odd shape)"

    # >1 MiB lane-aligned input exercising the forced >=2-block (megacore) split.
    xs = jax.random.normal(jax.random.PRNGKey(3), (768, 512), dtype=jnp.float32)
    ys = relu(xs)
    jax.block_until_ready(ys)
    assert bool(jnp.allclose(ys, jnp.maximum(0.0, xs))), "mismatch vs reference ReLU (split)"

    # >1 MiB input with a narrow ragged last dim: lane-dense prefix + tail path.
    xn = jax.random.normal(jax.random.PRNGKey(4), (8191, 50), dtype=jnp.float32)
    yn = relu(xn)
    jax.block_until_ready(yn)
    assert yn.shape == xn.shape
    assert bool(jnp.allclose(yn, jnp.maximum(0.0, xn))), "mismatch vs reference ReLU (narrow)"

    print("KERNEL_OK")
</pallas_src>

<mosaic_0001>
module attributes {stable_mosaic.version = 11 : i64} {
  func.func @_relu_kernel(%arg0: i32, %arg1: memref<4x128xf32, #tpu.memory_space<vmem>>, %arg2: memref<4x128xf32, #tpu.memory_space<vmem>>) attributes {dimension_semantics = [#tpu.dimension_semantics<parallel>], iteration_bounds = array<i64: 1>, scalar_prefetch = 0 : i64, scratch_operands = 0 : i64, tpu.core_type = #tpu.core_type<tc>, window_params = [{transform_indices = @transform_0, window_bounds = array<i64: 4, 128>}, {transform_indices = @transform_1, window_bounds = array<i64: 4, 128>}]} {
    %c0 = arith.constant 0 : index
    %c0_0 = arith.constant 0 : index
    %0 = vector.load %arg1[%c0, %c0_0] : memref<4x128xf32, #tpu.memory_space<vmem>>, vector<4x128xf32>
    %cst = arith.constant 0.000000e+00 : f32
    %1 = vector.broadcast %cst : f32 to vector<4x128xf32>
    %2 = arith.maximumf %0, %1 : vector<4x128xf32>
    %c0_1 = arith.constant 0 : index
    %c0_2 = arith.constant 0 : index
    %3 = vector.load %arg2[%c0_1, %c0_2] : memref<4x128xf32, #tpu.memory_space<vmem>>, vector<4x128xf32>
    tpu.vector_store %arg2[%c0_1, %c0_2], %2 {strides = array<i32>} : memref<4x128xf32, #tpu.memory_space<vmem>>, vector<4x128xf32>,
    return
  }
  func.func @transform_0(%arg0: i32) -> (i32, i32) {
    %c0_i32 = arith.constant 0 : i32
    %c0_i32_0 = arith.constant 0 : i32
    return %arg0, %c0_i32 : i32, i32
  }
  func.func @transform_1(%arg0: i32) -> (i32, i32) {
    %c0_i32 = arith.constant 0 : i32
    %c0_i32_0 = arith.constant 0 : i32
    return %arg0, %c0_i32 : i32, i32
  }
}

</mosaic_0001>

<llo_original>
// kernel: tpu_custom_call.1
$region0: #{tpu_custom_call.1}
  #allocation0 [shape = 'u32[]', space=smem, size = 0x4, offset = 0x4, fixed_abs, tag = 'smem constant byte address 0x4 - core index']
  #allocation1 [shape = 'u32[144,128]{1,0:T(1,128)}', space=vmem, size = 0x12000, scoped, tag = 'internal scratch']
  %s0 = inlined_call_operand.hbm [shape: f32[4,128], index: 0, kind: input, shape index: {}]
  %s1 = inlined_call_operand.hbm [shape: f32[4,128], index: 1, kind: output, shape index: {}]
  %s2 = sld [smem:[#allocation0]]
  $region18: #{tpu_custom_call.1} parent=0
    _
  %s4 = ssub.s32 1, %s2
  %s5 = scalar_select 0, %s4, %s2
  $region1: #{tpu_custom_call.1} parent=0
    #allocation2 [shape = 'u8[2048]{0}', space=vmem, size = 0x800, scoped, tag = 'input window, operand 0, single buffered']
    #allocation3 [shape = 's32[1]{0}', space=sflag, size = 0x4, scoped, tag = 'scoped memory for tpu_custom_call.1']
    #allocation4 [shape = 's32[1]{0}', space=sflag, size = 0x4, scoped, tag = 'scoped memory for tpu_custom_call.1']
    #allocation5 [shape = 'u8[2048]{0}', space=vmem, size = 0x800, scoped, tag = 'output window, operand 0, single buffered']
    %6 = vsyncpa [#allocation3], 0
    %7 = vsyncpa [#allocation4], 0
    // Predicated region
    $region2: #{tpu_custom_call.1} parent=1 // pred_check
      _
    $region3: #{tpu_custom_call.1} parent=1 // pred_check_branch
      %9 = sbr.rel (0) target = $region5
    $region4: #{tpu_custom_call.1} parent=1 // pred_region
      %s11 = ssub.s32 64, 64
      %12 = vsyncadd [#allocation3], %s11
      %s14 = sshll.u32 [#allocation2], 4
      %s15 = int_to_ptr.vmem [resolvable:$true] %s14
      %17 = dma.hbm_to_vmem [thread:$0]  %s0, 64, %s15, [#allocation3]
    $region5: #{tpu_custom_call.1} parent=1 // pred_fallthru
      _
    // Predicated region
    $region6: #{tpu_custom_call.1} parent=1 // pred_check
      _
    $region7: #{tpu_custom_call.1} parent=1 // pred_check_branch
      %19 = sbr.rel (0) target = $region9
    $region8: #{tpu_custom_call.1} parent=1 // pred_region
      %20 = dma.done [#allocation3], 64
    $region9: #{tpu_custom_call.1} parent=1 // pred_fallthru
      _
    %v21 = vld [vmem:[#allocation2] sm:$0xf]
    %v22 = vmax.f32 %v21, 0.0
    %23 = vst [vmem:[#allocation5] sm:$0xf] %v22
    // Predicated region
    $region10: #{tpu_custom_call.1} parent=1 // pred_check
      _
    $region11: #{tpu_custom_call.1} parent=1 // pred_check_branch
      %25 = sbr.rel (0) target = $region13
    $region12: #{tpu_custom_call.1} parent=1 // pred_region
      %s27 = ssub.s32 64, 64
      %28 = vsyncadd [#allocation4], %s27
      %s30 = sshll.u32 [#allocation5], 4
      %s31 = int_to_ptr.vmem [resolvable:$true] %s30
      %33 = dma.vmem_to_hbm [thread:$0]  %s31, 64, %s1, [#allocation4]
    $region13: #{tpu_custom_call.1} parent=1 // pred_fallthru
      _
    // Predicated region
    $region14: #{tpu_custom_call.1} parent=1 // pred_check
      _
    $region15: #{tpu_custom_call.1} parent=1 // pred_check_branch
      %35 = sbr.rel (0) target = $region17
    $region16: #{tpu_custom_call.1} parent=1 // pred_region
      %36 = dma.done [#allocation4], 64
    $region17: #{tpu_custom_call.1} parent=1 // pred_fallthru
      _
    %37 = vsyncpa [#allocation3], 1
    %38 = vsyncpa [#allocation4], 1

</llo_original>
